<compile_context>
chip_gen: v7x
topology: tpu7x:2x2x1
jax: 0.10.0
libtpu: 0.0.40
codegen_flags: <defaults>
</compile_context>

<pallas_src>
import functools

import jax
import jax.numpy as jnp
from jax.experimental import pallas as pl
from jax.experimental.pallas import tpu as pltpu

LOG_STD_MAX = 2.0
LOG_STD_MIN = -5.0

HEAD_P = 128  # lane-dense fused head width (mean | log_std | zero pad)


def _round_up(x, m):
    return ((x + m - 1) // m) * m


# ----------------------------------------------------------------------------
# Kernel
# ----------------------------------------------------------------------------
def actor_kernel(act_dim, x_ref, w1_ref, w2_ref, wh_ref, bias_ref, out_ref):
    hidden = w2_ref.shape[0]

    # fc1 + relu.  b1 is folded into w1 (x carries a matching ones column),
    # so this is a single bf16 x bf16 -> f32 MXU pass.
    h1 = jnp.dot(x_ref[...], w1_ref[...], preferred_element_type=jnp.float32)
    h1 = jnp.maximum(h1, 0.0)

    # fc2 + relu (bias comes from the packed bias array, added in f32)
    b2 = bias_ref[:, :hidden]
    h2 = jnp.dot(h1.astype(jnp.bfloat16), w2_ref[...],
                 preferred_element_type=jnp.float32)
    h2 = jnp.maximum(h2 + b2, 0.0)

    # fused heads: one (hidden x 128) matmul; cols [0,A)=mean, [A,2A)=logstd
    bh = bias_ref[:, hidden:]
    head = jnp.dot(h2.astype(jnp.bfloat16), wh_ref[...],
                   preferred_element_type=jnp.float32) + bh

    # log_std branch: tanh squash then rescale to [LOG_STD_MIN, LOG_STD_MAX]
    # (f32 epilogue on purpose: v5e has no bf16 VPU/EUP path).
    ls = jnp.tanh(head)
    ls = LOG_STD_MIN + 0.5 * (LOG_STD_MAX - LOG_STD_MIN) * (ls + 1.0)

    # per-column select: mean columns keep the raw affine output, columns
    # >= act_dim get the log_std transform (cols >= 2*act_dim are padding,
    # sliced away in the wrapper).
    col = jax.lax.broadcasted_iota(jnp.int32, head.shape, 1)
    out_ref[...] = jnp.where(col < act_dim, head, ls).astype(out_ref.dtype)


# ----------------------------------------------------------------------------
# One-time parameter preparation (do this ONCE, reuse across calls)
# ----------------------------------------------------------------------------
def prepare_params(params):
    """Pad / fuse / cast parameters for the kernel.  Call once and cache.

    Returns a dict of device arrays:
      w1  : (OBS_K, hidden)  bf16  fc1 weight; row `obs_dim` holds b1 (the x
                                   tile carries a matching ones column),
                                   rows beyond are zero.
      w2  : (hidden, hidden) bf16
      wh  : (hidden, 128)    bf16  fused head: fc_mean cols [0,A),
                                   fc_logstd cols [A,2A), zeros beyond.
      bias: (1, hidden+128)  f32   packed [b2 | bm | bs | 0-pad].
    """
    obs_dim, hidden = params["w1"].shape
    act_dim = params["wm"].shape[1]
    assert 2 * act_dim <= HEAD_P, "fused head assumes 2*act_dim <= 128"
    bf16, f32 = jnp.bfloat16, jnp.float32

    obs_k = _round_up(obs_dim + 1, 16)  # +1 ones column for folded b1

    w1 = jnp.zeros((obs_k, hidden), bf16)
    w1 = w1.at[:obs_dim, :].set(params["w1"].astype(bf16))
    w1 = w1.at[obs_dim, :].set(params["b1"].reshape(-1).astype(bf16))

    w2 = params["w2"].astype(bf16)

    wh = jnp.zeros((hidden, HEAD_P), bf16)
    wh = wh.at[:, :act_dim].set(params["wm"].astype(bf16))
    wh = wh.at[:, act_dim:2 * act_dim].set(params["ws"].astype(bf16))

    bias = jnp.zeros((1, hidden + HEAD_P), f32)
    bias = bias.at[:, :hidden].set(params["b2"].reshape(1, -1).astype(f32))
    bias = bias.at[:, hidden:hidden + act_dim].set(
        params["bm"].reshape(1, -1).astype(f32))
    bias = bias.at[:, hidden + act_dim:hidden + 2 * act_dim].set(
        params["bs"].reshape(1, -1).astype(f32))

    return dict(w1=w1, w2=w2, wh=wh, bias=bias)


# ----------------------------------------------------------------------------
# Forward wrapper
# ----------------------------------------------------------------------------
def actor_forward(x, prep, *, act_dim, block_b=1024, out_dtype=jnp.bfloat16):
    """x: (B, obs_dim) f32.  prep: output of prepare_params (cached).

    Returns (mean, log_std), each (B, act_dim) f32.
    """
    B, obs_dim = x.shape
    obs_k, hidden = prep["w1"].shape
    assert obs_dim + 1 <= obs_k, "x does not match prepared parameters"

    # batch tile: multiple of 16 (bf16 sublane packing; also keeps the
    # (8,128) block constraint even for odd block_b values).
    TB = _round_up(min(block_b, max(B, 1)), 16)
    B_pad = _round_up(B, TB)
    if B_pad // TB == 1 and B > 16:
        # v7x megacore: give the grid >= 2 steps so both TensorCores get work
        # (skipped for tiny batches; grid=(1,) cannot be sharded anyway).
        TB = _round_up((B + 1) // 2, 16)
        B_pad = _round_up(B, TB)

    bf16 = jnp.bfloat16
    # Per-call activation prep only: bf16 cast, zero pad, ones column for the
    # folded fc1 bias.  Weight prep lives in prepare_params (done once).
    xb = jnp.zeros((B_pad, obs_k), bf16)
    xb = xb.at[:B, :obs_dim].set(x.astype(bf16))
    xb = xb.at[:B, obs_dim].set(1.0)

    out = pl.pallas_call(
        functools.partial(actor_kernel, act_dim),
        out_shape=jax.ShapeDtypeStruct((B_pad, HEAD_P), out_dtype),
        grid_spec=pltpu.PrefetchScalarGridSpec(
            num_scalar_prefetch=0,
            grid=(B_pad // TB,),
            in_specs=[
                pl.BlockSpec((TB, obs_k), lambda i: (i, 0)),           # x tile
                pl.BlockSpec((obs_k, hidden), lambda i: (0, 0)),       # w1+b1
                pl.BlockSpec((hidden, hidden), lambda i: (0, 0)),      # w2
                pl.BlockSpec((hidden, HEAD_P), lambda i: (0, 0)),      # fused head W
                pl.BlockSpec((1, hidden + HEAD_P), lambda i: (0, 0)),  # packed biases
            ],
            out_specs=pl.BlockSpec((TB, HEAD_P), lambda i: (i, 0)),
        ),
        compiler_params=pltpu.CompilerParams(
            dimension_semantics=("parallel",)),   # v7x: shard batch over 2 TCs
    )(xb, prep["w1"], prep["w2"], prep["wh"], prep["bias"])

    # single slice of the useful columns, tiny f32 cast, then split
    packed = out[:B, :2 * act_dim].astype(jnp.float32)
    return packed[:, :act_dim], packed[:, act_dim:]


def make_actor_forward(params, *, block_b=1024, out_dtype=jnp.bfloat16):
    """Prepare parameters once and return a jitted forward: x -> (mean, log_std)."""
    prep = prepare_params(params)          # one-time pad/fuse/cast
    act_dim = params["wm"].shape[1]
    fwd = jax.jit(functools.partial(actor_forward, act_dim=act_dim,
                                    block_b=block_b, out_dtype=out_dtype))
    return lambda x: fwd(x, prep)


# ----------------------------------------------------------------------------
# Init + references
# ----------------------------------------------------------------------------
def init_params(key, obs_dim, hidden, act_dim):
    """Deterministic init mimicking nn.Linear defaults (uniform +-1/sqrt(fan_in)).

    Weights are stored (in_features, out_features); biases as (1, out_features).
    """
    def linear(k, fan_in, fan_out):
        kw, kb = jax.random.split(k)
        bound = 1.0 / jnp.sqrt(fan_in)
        w = jax.random.uniform(kw, (fan_in, fan_out), jnp.float32, -bound, bound)
        b = jax.random.uniform(kb, (1, fan_out), jnp.float32, -bound, bound)
        return w, b

    k1, k2, k3, k4 = jax.random.split(key, 4)
    w1, b1 = linear(k1, obs_dim, hidden)
    w2, b2 = linear(k2, hidden, hidden)
    wm, bm = linear(k3, hidden, act_dim)
    ws, bs = linear(k4, hidden, act_dim)
    return dict(w1=w1, b1=b1, w2=w2, b2=b2, wm=wm, bm=bm, ws=ws, bs=bs)


def actor_forward_ref_bf16(x, p):
    """Pure-JAX reference mirroring the kernel's bf16-in / f32-accumulate math."""
    bf16, f32 = jnp.bfloat16, jnp.float32
    h1 = jnp.dot(x.astype(bf16), p["w1"].astype(bf16),
                 preferred_element_type=f32) + p["b1"]
    h1 = jnp.maximum(h1, 0.0)
    h2 = jnp.dot(h1.astype(bf16), p["w2"].astype(bf16),
                 preferred_element_type=f32) + p["b2"]
    h2 = jnp.maximum(h2, 0.0)
    mean = jnp.dot(h2.astype(bf16), p["wm"].astype(bf16),
                   preferred_element_type=f32) + p["bm"]
    ls = jnp.tanh(jnp.dot(h2.astype(bf16), p["ws"].astype(bf16),
                          preferred_element_type=f32) + p["bs"])
    log_std = LOG_STD_MIN + 0.5 * (LOG_STD_MAX - LOG_STD_MIN) * (ls + 1.0)
    return mean, log_std


def actor_forward_ref_f32(x, p):
    """Full-precision reference (original module semantics)."""
    h1 = jnp.maximum(x @ p["w1"] + p["b1"], 0.0)
    h2 = jnp.maximum(h1 @ p["w2"] + p["b2"], 0.0)
    mean = h2 @ p["wm"] + p["bm"]
    ls = jnp.tanh(h2 @ p["ws"] + p["bs"])
    log_std = LOG_STD_MIN + 0.5 * (LOG_STD_MAX - LOG_STD_MIN) * (ls + 1.0)
    return mean, log_std


if __name__ == "__main__":
    # Small shapes consistent with a typical env: obs_dim=8, act_dim=4, batch=8.
    B, OBS, HIDDEN, ACT = 8, 8, 256, 4

    key = jax.random.PRNGKey(0)
    k_x, k_p = jax.random.split(key)
    x = jax.random.normal(k_x, (B, OBS), jnp.float32)
    params = init_params(k_p, OBS, HIDDEN, ACT)

    actor = make_actor_forward(params)     # one-time prep + jit
    mean, log_std = actor(x)
    jax.block_until_ready((mean, log_std))

    # Cross-check against a bf16-matched pure-JAX reference (tolerances account
    # for the bf16 output slab + bf16-folded b1) and the full-f32 reference
    # (loose: bf16 quantization of inputs/weights/output is a deliberate,
    # documented deviation from the PyTorch f32 semantics).
    mean_bf, log_std_bf = actor_forward_ref_bf16(x, params)
    assert jnp.allclose(mean, mean_bf, atol=3e-2, rtol=3e-2)
    assert jnp.allclose(log_std, log_std_bf, atol=3e-2, rtol=3e-2)

    mean_f32, log_std_f32 = actor_forward_ref_f32(x, params)
    assert jnp.allclose(mean, mean_f32, atol=7e-2, rtol=7e-2)
    assert jnp.allclose(log_std, log_std_f32, atol=7e-2, rtol=7e-2)

    print("KERNEL_OK")
</pallas_src>

<mosaic_0001>
module attributes {stable_mosaic.version = 11 : i64} {
  func.func @actor_kernel(%arg0: i32, %arg1: memref<16x16xbf16, #tpu.memory_space<vmem>>, %arg2: memref<16x256xbf16, #tpu.memory_space<vmem>>, %arg3: memref<256x256xbf16, #tpu.memory_space<vmem>>, %arg4: memref<256x128xbf16, #tpu.memory_space<vmem>>, %arg5: memref<1x384xf32, #tpu.memory_space<vmem>>, %arg6: memref<16x128xbf16, #tpu.memory_space<vmem>>) attributes {dimension_semantics = [#tpu.dimension_semantics<parallel>], iteration_bounds = array<i64: 1>, scalar_prefetch = 0 : i64, scratch_operands = 0 : i64, tpu.core_type = #tpu.core_type<tc>, window_params = [{transform_indices = @transform_0, window_bounds = array<i64: 16, 16>}, {pipeline_mode = #tpu.pipeline_mode<synchronous>, transform_indices = @transform_1, window_bounds = array<i64: 16, 256>}, {pipeline_mode = #tpu.pipeline_mode<synchronous>, transform_indices = @transform_2, window_bounds = array<i64: 256, 256>}, {pipeline_mode = #tpu.pipeline_mode<synchronous>, transform_indices = @transform_3, window_bounds = array<i64: 256, 128>}, {pipeline_mode = #tpu.pipeline_mode<synchronous>, transform_indices = @transform_4, window_bounds = array<i64: 1, 384>}, {transform_indices = @transform_5, window_bounds = array<i64: 16, 128>}]} {
    %c0 = arith.constant 0 : index
    %c0_0 = arith.constant 0 : index
    %0 = vector.load %arg1[%c0, %c0_0] : memref<16x16xbf16, #tpu.memory_space<vmem>>, vector<16x16xbf16>
    %c0_1 = arith.constant 0 : index
    %c0_2 = arith.constant 0 : index
    %1 = vector.load %arg2[%c0_1, %c0_2] : memref<16x256xbf16, #tpu.memory_space<vmem>>, vector<16x256xbf16>
    %cst = arith.constant dense<0.000000e+00> : vector<16x256xf32>
    %2 = tpu.matmul %0, %1, %cst {dimension_numbers = #tpu.dot_dimension_numbers<[1], [0], [0], [1], [0, 0, 1, 1], [], []>} : vector<16x16xbf16>, vector<16x256xbf16>, vector<16x256xf32> -> vector<16x256xf32>
    %cst_3 = arith.constant 0.000000e+00 : f32
    %3 = vector.broadcast %cst_3 : f32 to vector<16x256xf32>
    %4 = arith.maximumf %2, %3 : vector<16x256xf32>
    %c0_4 = arith.constant 0 : index
    %c0_5 = arith.constant 0 : index
    %5 = vector.load %arg5[%c0_4, %c0_5] : memref<1x384xf32, #tpu.memory_space<vmem>>, vector<1x256xf32>
    %6 = arith.truncf %4 : vector<16x256xf32> to vector<16x256xbf16>
    %c0_6 = arith.constant 0 : index
    %c0_7 = arith.constant 0 : index
    %7 = vector.load %arg3[%c0_6, %c0_7] : memref<256x256xbf16, #tpu.memory_space<vmem>>, vector<256x256xbf16>
    %cst_8 = arith.constant dense<0.000000e+00> : vector<16x256xf32>
    %8 = tpu.matmul %6, %7, %cst_8 {dimension_numbers = #tpu.dot_dimension_numbers<[1], [0], [0], [1], [0, 0, 1, 1], [], []>} : vector<16x256xbf16>, vector<256x256xbf16>, vector<16x256xf32> -> vector<16x256xf32>
    %9 = vector.broadcast %5 : vector<1x256xf32> to vector<16x256xf32>
    %10 = arith.addf %8, %9 : vector<16x256xf32>
    %cst_9 = arith.constant 0.000000e+00 : f32
    %11 = vector.broadcast %cst_9 : f32 to vector<16x256xf32>
    %12 = arith.maximumf %10, %11 : vector<16x256xf32>
    %c0_10 = arith.constant 0 : index
    %c256 = arith.constant 256 : index
    %13 = vector.load %arg5[%c0_10, %c256] : memref<1x384xf32, #tpu.memory_space<vmem>>, vector<1x128xf32>
    %14 = arith.truncf %12 : vector<16x256xf32> to vector<16x256xbf16>
    %c0_11 = arith.constant 0 : index
    %c0_12 = arith.constant 0 : index
    %15 = vector.load %arg4[%c0_11, %c0_12] : memref<256x128xbf16, #tpu.memory_space<vmem>>, vector<256x128xbf16>
    %cst_13 = arith.constant dense<0.000000e+00> : vector<16x128xf32>
    %16 = tpu.matmul %14, %15, %cst_13 {dimension_numbers = #tpu.dot_dimension_numbers<[1], [0], [0], [1], [0, 0, 1, 1], [], []>} : vector<16x256xbf16>, vector<256x128xbf16>, vector<16x128xf32> -> vector<16x128xf32>
    %17 = vector.broadcast %13 : vector<1x128xf32> to vector<16x128xf32>
    %18 = arith.addf %16, %17 : vector<16x128xf32>
    %19 = math.tanh %18 : vector<16x128xf32>
    %cst_14 = arith.constant 1.000000e+00 : f32
    %20 = vector.broadcast %cst_14 : f32 to vector<16x128xf32>
    %21 = arith.addf %19, %20 : vector<16x128xf32>
    %cst_15 = arith.constant 3.500000e+00 : f32
    %22 = vector.broadcast %cst_15 : f32 to vector<16x128xf32>
    %23 = arith.mulf %22, %21 : vector<16x128xf32>
    %cst_16 = arith.constant -5.000000e+00 : f32
    %24 = vector.broadcast %cst_16 : f32 to vector<16x128xf32>
    %25 = arith.addf %24, %23 : vector<16x128xf32>
    %26 = tpu.iota {dimensions = array<i32: 1>} : vector<16x128xi32>
    %c4_i32 = arith.constant 4 : i32
    %27 = vector.broadcast %c4_i32 : i32 to vector<16x128xi32>
    %28 = arith.cmpi slt, %26, %27 : vector<16x128xi32>
    %29 = arith.select %28, %18, %25 : vector<16x128xi1>, vector<16x128xf32>
    %30 = arith.truncf %29 : vector<16x128xf32> to vector<16x128xbf16>
    %c0_17 = arith.constant 0 : index
    %c0_18 = arith.constant 0 : index
    %31 = vector.load %arg6[%c0_17, %c0_18] : memref<16x128xbf16, #tpu.memory_space<vmem>>, vector<16x128xbf16>
    tpu.vector_store %arg6[%c0_17, %c0_18], %30 {strides = array<i32>} : memref<16x128xbf16, #tpu.memory_space<vmem>>, vector<16x128xbf16>,
    return
  }
  func.func @transform_0(%arg0: i32) -> (i32, i32) {
    %c0_i32 = arith.constant 0 : i32
    %c0_i32_0 = arith.constant 0 : i32
    return %arg0, %c0_i32 : i32, i32
  }
  func.func @transform_1(%arg0: i32) -> (i32, i32) {
    %c0_i32 = arith.constant 0 : i32
    %c0_i32_0 = arith.constant 0 : i32
    %c0_i32_1 = arith.constant 0 : i32
    return %c0_i32, %c0_i32_0 : i32, i32
  }
  func.func @transform_2(%arg0: i32) -> (i32, i32) {
    %c0_i32 = arith.constant 0 : i32
    %c0_i32_0 = arith.constant 0 : i32
    %c0_i32_1 = arith.constant 0 : i32
    return %c0_i32, %c0_i32_0 : i32, i32
  }
  func.func @transform_3(%arg0: i32) -> (i32, i32) {
    %c0_i32 = arith.constant 0 : i32
    %c0_i32_0 = arith.constant 0 : i32
    %c0_i32_1 = arith.constant 0 : i32
    return %c0_i32, %c0_i32_0 : i32, i32
  }
  func.func @transform_4(%arg0: i32) -> (i32, i32) {
    %c0_i32 = arith.constant 0 : i32
    %c0_i32_0 = arith.constant 0 : i32
    %c0_i32_1 = arith.constant 0 : i32
    return %c0_i32, %c0_i32_0 : i32, i32
  }
  func.func @transform_5(%arg0: i32) -> (i32, i32) {
    %c0_i32 = arith.constant 0 : i32
    %c0_i32_0 = arith.constant 0 : i32
    return %arg0, %c0_i32 : i32, i32
  }
}

</mosaic_0001>

<llo_original>
// kernel: actor_forward.1
$region0: #{actor_forward.1}
  #allocation0 [shape = 'u32[]', space=smem, size = 0x4, offset = 0x4, fixed_abs, tag = 'smem constant byte address 0x4 - core index']
  #allocation1 [shape = 'u32[144,128]{1,0:T(1,128)}', space=vmem, size = 0x12000, scoped, tag = 'internal scratch']
  %s0 = inlined_call_operand.vmem [shape: bf16[16,16], index: 0, kind: input, shape index: {}]
  %s1 = inlined_call_operand.vmem [shape: bf16[16,256], index: 1, kind: input, shape index: {}]
  %s2 = inlined_call_operand.hbm [shape: bf16[256,256], index: 2, kind: input, shape index: {}]
  %s3 = inlined_call_operand.hbm [shape: bf16[256,128], index: 3, kind: input, shape index: {}]
  %s4 = inlined_call_operand.vmem [shape: f32[1,384], index: 4, kind: input, shape index: {}]
  %s5 = inlined_call_operand.vmem [shape: bf16[16,128], index: 5, kind: output, shape index: {}]
  %s6 = sld [smem:[#allocation0]]
  $region38: #{actor_forward.1} parent=0
    _
  %s8 = ssub.s32 1, %s6
  %s9 = scalar_select 0, %s8, %s6
  $region1: #{actor_forward.1} parent=0
    #allocation2 [shape = 'u8[131072]{0}', space=vmem, size = 0x20000, scoped, tag = 'input window, operand 2, single buffered']
    #allocation3 [shape = 's32[1]{0}', space=sflag, size = 0x4, scoped, tag = 'scoped memory for actor_forward.1']
    #allocation4 [shape = 'u8[65536]{0}', space=vmem, size = 0x10000, scoped, tag = 'input window, operand 3, single buffered']
    #allocation5 [shape = 's32[1]{0}', space=sflag, size = 0x4, scoped, tag = 'scoped memory for actor_forward.1']
    %10 = vsyncpa [#allocation3], 0
    %11 = vsyncpa [#allocation5], 0
    // Predicated region
    $region2: #{actor_forward.1} parent=1 // pred_check
      _
    $region3: #{actor_forward.1} parent=1 // pred_check_branch
      %13 = sbr.rel (0) target = $region5
    $region4: #{actor_forward.1} parent=1 // pred_region
      _
    $region5: #{actor_forward.1} parent=1 // pred_fallthru
      _
    // Predicated region
    $region6: #{actor_forward.1} parent=1 // pred_check
      _
    $region7: #{actor_forward.1} parent=1 // pred_check_branch
      %15 = sbr.rel (0) target = $region9
    $region8: #{actor_forward.1} parent=1 // pred_region
      _
    $region9: #{actor_forward.1} parent=1 // pred_fallthru
      _
    // Predicated region
    $region10: #{actor_forward.1} parent=1 // pred_check
      _
    $region11: #{actor_forward.1} parent=1 // pred_check_branch
      %17 = sbr.rel (0) target = $region13
    $region12: #{actor_forward.1} parent=1 // pred_region
      %s19 = ssub.s32 4096, 4096
      %20 = vsyncadd [#allocation3], %s19
      %s21 = sshll.u32 [#allocation2], 4
      %s22 = int_to_ptr.vmem [resolvable:$true] %s21
      %27 = dma.hbm_to_vmem [thread:$0]  %s2, 4096, %s22, [#allocation3], 128, 128, 8
    $region13: #{actor_forward.1} parent=1 // pred_fallthru
      _
    // Predicated region
    $region14: #{actor_forward.1} parent=1 // pred_check
      _
    $region15: #{actor_forward.1} parent=1 // pred_check_branch
      %29 = sbr.rel (0) target = $region17
    $region16: #{actor_forward.1} parent=1 // pred_region
      %s31 = ssub.s32 2048, 2048
      %32 = vsyncadd [#allocation5], %s31
      %s33 = sshll.u32 [#allocation4], 4
      %s34 = int_to_ptr.vmem [resolvable:$true] %s33
      %39 = dma.hbm_to_vmem [thread:$0]  %s3, 2048, %s34, [#allocation5], 64, 64, 4
    $region17: #{actor_forward.1} parent=1 // pred_fallthru
      _
    // Predicated region
    $region18: #{actor_forward.1} parent=1 // pred_check
      _
    $region19: #{actor_forward.1} parent=1 // pred_check_branch
      %41 = sbr.rel (0) target = $region21
    $region20: #{actor_forward.1} parent=1 // pred_region
      _
    $region21: #{actor_forward.1} parent=1 // pred_fallthru
      _
    // Predicated region
    $region22: #{actor_forward.1} parent=1 // pred_check
      _
    $region23: #{actor_forward.1} parent=1 // pred_check_branch
      %43 = sbr.rel (0) target = $region25
    $region24: #{actor_forward.1} parent=1 // pred_region
      %44 = dma.done [#allocation3], 4096
    $region25: #{actor_forward.1} parent=1 // pred_fallthru
      _
    // Predicated region
    $region26: #{actor_forward.1} parent=1 // pred_check
      _
    $region27: #{actor_forward.1} parent=1 // pred_check_branch
      %46 = sbr.rel (0) target = $region29
    $region28: #{actor_forward.1} parent=1 // pred_region
      %47 = dma.done [#allocation5], 2048
    $region29: #{actor_forward.1} parent=1 // pred_fallthru
      _
    %v49 = vld [vmem:[%s0] sm:$0xf]
    %v50 = vld [vmem:[%s0 + $0x4] sm:$0xf]
    %v51 = vld [vmem:[%s1] sm:$0xff]
    %v52 = vld [vmem:[%s1 + $0x8] sm:$0xff]
    %v55 = vunpack.c.l.b16 %v49
    %v56 = vunpack.c.l.b16 %v50
    %v57 = vpack.c.b16 %v56, %v55
    %v60 = vunpack.c.l.b16 %v51
    %v61 = vunpack.c.h.b16 %v51
    %v62 = vunpack.c.l.b16 %v52
    %v63 = vunpack.c.h.b16 %v52
    %v64 = vpack.c.b16 %v62, %v60
    %v65 = vpack.c.b16 %v63, %v61
    %vm68 = vcmask 130048
    %v70 = vsel %vm68, %v57, 0
    %72 = vmatprep.subr.bf16.mxu0 %v65
    %73 = vmatpush1.bf16.msra.mxu0 %v64
    %74 = vmatprep.subr.bf16.mxu0 0
    %75 = vmatpush1.bf16.msra.mxu0 0
    %76 = vmatprep.subr.bf16.mxu0 0
    %77 = vmatpush1.bf16.msra.mxu0 0
    %78 = vmatprep.subr.bf16.mxu0 0
    %79 = vmatpush1.bf16.msra.mxu0 0
    %80 = vmatprep.subr.bf16.mxu0 0
    %81 = vmatpush1.bf16.msra.mxu0 0
    %82 = vmatprep.subr.bf16.mxu0 0
    %83 = vmatpush1.bf16.msra.mxu0 0
    %84 = vmatprep.subr.bf16.mxu0 0
    %85 = vmatpush1.bf16.msra.mxu0 0
    %86 = vmatprep.subr.bf16.mxu0 0
    %87 = vmatpush1.bf16.msra.mxu0 0
    %88 = vmatprep.subr.bf16.mxu0 0
    %89 = vmatpush1.bf16.msra.mxu0 0
    %90 = vmatprep.subr.bf16.mxu0 0
    %91 = vmatpush1.bf16.msra.mxu0 0
    %92 = vmatprep.subr.bf16.mxu0 0
    %93 = vmatpush1.bf16.msra.mxu0 0
    %94 = vmatprep.subr.bf16.mxu0 0
    %95 = vmatpush1.bf16.msra.mxu0 0
    %96 = vmatprep.subr.bf16.mxu0 0
    %97 = vmatpush1.bf16.msra.mxu0 0
    %98 = vmatprep.subr.bf16.mxu0 0
    %99 = vmatpush1.bf16.msra.mxu0 0
    %100 = vmatprep.subr.bf16.mxu0 0
    %101 = vmatpush1.bf16.msra.mxu0 0
    %102 = vmatprep.subr.bf16.mxu0 0
    %103 = vmatpush1.bf16.msra.mxu0 0
    %104 = vmatprep.mubr.bf16.mxu0 0
    %105 = vmatmul.mubr.bf16.gmra.mrb[0].mxu0 %v70
    %v106 = vpop.f32.mrb[0].mxu0
    %v107 = vadd.f32 0.0, %v106
    %v108 = vpop.f32.mrb[0].mxu0
    %v109 = vadd.f32 0.0, %v108
    %v110 = vpop.f32.mrb[0].mxu0
    %v111 = vadd.f32 0.0, %v110
    %v112 = vpop.f32.mrb[0].mxu0
    %v113 = vadd.f32 0.0, %v112
    %114 = vdwg.mxu0
    %v115 = vmax.f32 %v107, 0.0
    %v116 = vmax.f32 %v109, 0.0
    %v117 = vmax.f32 %v111, 0.0
    %v118 = vmax.f32 %v113, 0.0
    %v119 = vld [vmem:[%s4] sm:$0x3]
    %v120 = vpack.c.bf16 %v117, %v115
    %v121 = vpack.c.bf16 %v118, %v116
    %v122 = vld [vmem:[#allocation2] sm:$0xff]
    %v123 = vld [vmem:[#allocation2 + $0x8] sm:$0xff]
    %v124 = vld [vmem:[#allocation2 + $0x10] sm:$0xff]
    %v125 = vld [vmem:[#allocation2 + $0x18] sm:$0xff]
    %v126 = vld [vmem:[#allocation2 + $0x20] sm:$0xff]
    %v127 = vld [vmem:[#allocation2 + $0x28] sm:$0xff]
    %v128 = vld [vmem:[#allocation2 + $0x30] sm:$0xff]
    %v129 = vld [vmem:[#allocation2 + $0x38] sm:$0xff]
    %v130 = vld [vmem:[#allocation2 + $0x40] sm:$0xff]
    %v131 = vld [vmem:[#allocation2 + $0x48] sm:$0xff]
    %v132 = vld [vmem:[#allocation2 + $0x50] sm:$0xff]
    %v133 = vld [vmem:[#allocation2 + $0x58] sm:$0xff]
    %v134 = vld [vmem:[#allocation2 + $0x60] sm:$0xff]
    %v135 = vld [vmem:[#allocation2 + $0x68] sm:$0xff]
    %v136 = vld [vmem:[#allocation2 + $0x70] sm:$0xff]
    %v137 = vld [vmem:[#allocation2 + $0x78] sm:$0xff]
    %v138 = vld [vmem:[#allocation2 + $0x80] sm:$0xff]
    %v139 = vld [vmem:[#allocation2 + $0x88] sm:$0xff]
    %v140 = vld [vmem:[#allocation2 + $0x90] sm:$0xff]
    %v141 = vld [vmem:[#allocation2 + $0x98] sm:$0xff]
    %v142 = vld [vmem:[#allocation2 + $0xa0] sm:$0xff]
    %v143 = vld [vmem:[#allocation2 + $0xa8] sm:$0xff]
    %v144 = vld [vmem:[#allocation2 + $0xb0] sm:$0xff]
    %v145 = vld [vmem:[#allocation2 + $0xb8] sm:$0xff]
    %v146 = vld [vmem:[#allocation2 + $0xc0] sm:$0xff]
    %v147 = vld [vmem:[#allocation2 + $0xc8] sm:$0xff]
    %v148 = vld [vmem:[#allocation2 + $0xd0] sm:$0xff]
    %v149 = vld [vmem:[#allocation2 + $0xd8] sm:$0xff]
    %v150 = vld [vmem:[#allocation2 + $0xe0] sm:$0xff]
    %v151 = vld [vmem:[#allocation2 + $0xe8] sm:$0xff]
    %v152 = vld [vmem:[#allocation2 + $0xf0] sm:$0xff]
    %v153 = vld [vmem:[#allocation2 + $0xf8] sm:$0xff]
    %v155 = vlaneseq
    %v156 = vshrl.u32 %v155, 7
    %v157 = vsub.s32 0, %v156
    %v158 = vrot.slane %v119, %v157
    %v159 = vlaneseq
    %v160 = vshrl.u32 %v159, 7
    %v161 = vsub.s32 1, %v160
    %v162 = vrot.slane %v119, %v161
    %v197 = vunpack.c.l.b16 %v122
    %v198 = vunpack.c.h.b16 %v122
    %v199 = vunpack.c.l.b16 %v123
    %v200 = vunpack.c.h.b16 %v123
    %v201 = vunpack.c.l.b16 %v124
    %v202 = vunpack.c.h.b16 %v124
    %v203 = vunpack.c.l.b16 %v125
    %v204 = vunpack.c.h.b16 %v125
    %v205 = vunpack.c.l.b16 %v126
    %v206 = vunpack.c.h.b16 %v126
    %v207 = vunpack.c.l.b16 %v127
    %v208 = vunpack.c.h.b16 %v127
    %v209 = vunpack.c.l.b16 %v128
    %v210 = vunpack.c.h.b16 %v128
    %v211 = vunpack.c.l.b16 %v129
    %v212 = vunpack.c.h.b16 %v129
    %v213 = vunpack.c.l.b16 %v130
    %v214 = vunpack.c.h.b16 %v130
    %v215 = vunpack.c.l.b16 %v131
    %v216 = vunpack.c.h.b16 %v131
    %v217 = vunpack.c.l.b16 %v132
    %v218 = vunpack.c.h.b16 %v132
    %v219 = vunpack.c.l.b16 %v133
    %v220 = vunpack.c.h.b16 %v133
    %v221 = vunpack.c.l.b16 %v134
    %v222 = vunpack.c.h.b16 %v134
    %v223 = vunpack.c.l.b16 %v135
    %v224 = vunpack.c.h.b16 %v135
    %v225 = vunpack.c.l.b16 %v136
    %v226 = vunpack.c.h.b16 %v136
    %v227 = vunpack.c.l.b16 %v137
    %v228 = vunpack.c.h.b16 %v137
    %v229 = vunpack.c.l.b16 %v138
    %v230 = vunpack.c.h.b16 %v138
    %v231 = vunpack.c.l.b16 %v139
    %v232 = vunpack.c.h.b16 %v139
    %v233 = vunpack.c.l.b16 %v140
    %v234 = vunpack.c.h.b16 %v140
    %v235 = vunpack.c.l.b16 %v141
    %v236 = vunpack.c.h.b16 %v141
    %v237 = vunpack.c.l.b16 %v142
    %v238 = vunpack.c.h.b16 %v142
    %v239 = vunpack.c.l.b16 %v143
    %v240 = vunpack.c.h.b16 %v143
    %v241 = vunpack.c.l.b16 %v144
    %v242 = vunpack.c.h.b16 %v144
    %v243 = vunpack.c.l.b16 %v145
    %v244 = vunpack.c.h.b16 %v145
    %v245 = vunpack.c.l.b16 %v146
    %v246 = vunpack.c.h.b16 %v146
    %v247 = vunpack.c.l.b16 %v147
    %v248 = vunpack.c.h.b16 %v147
    %v249 = vunpack.c.l.b16 %v148
    %v250 = vunpack.c.h.b16 %v148
    %v251 = vunpack.c.l.b16 %v149
    %v252 = vunpack.c.h.b16 %v149
    %v253 = vunpack.c.l.b16 %v150
    %v254 = vunpack.c.h.b16 %v150
    %v255 = vunpack.c.l.b16 %v151
    %v256 = vunpack.c.h.b16 %v151
    %v257 = vunpack.c.l.b16 %v152
    %v258 = vunpack.c.h.b16 %v152
    %v259 = vunpack.c.l.b16 %v153
    %v260 = vunpack.c.h.b16 %v153
    %v261 = vpack.c.b16 %v199, %v197
    %v262 = vpack.c.b16 %v200, %v198
    %v263 = vpack.c.b16 %v203, %v201
    %v264 = vpack.c.b16 %v204, %v202
    %v265 = vpack.c.b16 %v207, %v205
    %v266 = vpack.c.b16 %v208, %v206
    %v267 = vpack.c.b16 %v211, %v209
    %v268 = vpack.c.b16 %v212, %v210
    %v269 = vpack.c.b16 %v215, %v213
    %v270 = vpack.c.b16 %v216, %v214
    %v271 = vpack.c.b16 %v219, %v217
    %v272 = vpack.c.b16 %v220, %v218
    %v273 = vpack.c.b16 %v223, %v221
    %v274 = vpack.c.b16 %v224, %v222
    %v275 = vpack.c.b16 %v227, %v225
    %v276 = vpack.c.b16 %v228, %v226
    %v277 = vpack.c.b16 %v231, %v229
    %v278 = vpack.c.b16 %v232, %v230
    %v279 = vpack.c.b16 %v235, %v233
    %v280 = vpack.c.b16 %v236, %v234
    %v281 = vpack.c.b16 %v239, %v237
    %v282 = vpack.c.b16 %v240, %v238
    %v283 = vpack.c.b16 %v243, %v241
    %v284 = vpack.c.b16 %v244, %v242
    %v285 = vpack.c.b16 %v247, %v245
    %v286 = vpack.c.b16 %v248, %v246
    %v287 = vpack.c.b16 %v251, %v249
    %v288 = vpack.c.b16 %v252, %v250
    %v289 = vpack.c.b16 %v255, %v253
    %v290 = vpack.c.b16 %v256, %v254
    %v291 = vpack.c.b16 %v259, %v257
    %v292 = vpack.c.b16 %v260, %v258
    %325 = vmatprep.subr.bf16.mxu0 %v262
    %326 = vmatpush1.bf16.msra.mxu0 %v261
    %327 = vmatprep.subr.bf16.mxu0 %v264
    %328 = vmatpush1.bf16.msra.mxu0 %v263
    %329 = vmatprep.subr.bf16.mxu0 %v266
    %330 = vmatpush1.bf16.msra.mxu0 %v265
    %331 = vmatprep.subr.bf16.mxu0 %v268
    %332 = vmatpush1.bf16.msra.mxu0 %v267
    %333 = vmatprep.subr.bf16.mxu0 %v270
    %334 = vmatpush1.bf16.msra.mxu0 %v269
    %335 = vmatprep.subr.bf16.mxu0 %v272
    %336 = vmatpush1.bf16.msra.mxu0 %v271
    %337 = vmatprep.subr.bf16.mxu0 %v274
    %338 = vmatpush1.bf16.msra.mxu0 %v273
    %339 = vmatprep.subr.bf16.mxu0 %v276
    %340 = vmatpush1.bf16.msra.mxu0 %v275
    %341 = vmatprep.subr.bf16.mxu0 %v278
    %342 = vmatpush1.bf16.msra.mxu0 %v277
    %343 = vmatprep.subr.bf16.mxu0 %v280
    %344 = vmatpush1.bf16.msra.mxu0 %v279
    %345 = vmatprep.subr.bf16.mxu0 %v282
    %346 = vmatpush1.bf16.msra.mxu0 %v281
    %347 = vmatprep.subr.bf16.mxu0 %v284
    %348 = vmatpush1.bf16.msra.mxu0 %v283
    %349 = vmatprep.subr.bf16.mxu0 %v286
    %350 = vmatpush1.bf16.msra.mxu0 %v285
    %351 = vmatprep.subr.bf16.mxu0 %v288
    %352 = vmatpush1.bf16.msra.mxu0 %v287
    %353 = vmatprep.subr.bf16.mxu0 %v290
    %354 = vmatpush1.bf16.msra.mxu0 %v289
    %355 = vmatprep.subr.bf16.mxu0 %v292
    %356 = vmatpush1.bf16.msra.mxu0 %v291
    %357 = vmatprep.mubr.bf16.mxu0 %v121
    %358 = vmatmul.mubr.bf16.gmra.mrb[0].mxu0 %v120
    %v359 = vpop.f32.mrb[0].mxu0
    %v360 = vadd.f32 %v158, %v359
    %v361 = vpop.f32.mrb[0].mxu0
    %v362 = vadd.f32 %v162, %v361
    %v363 = vpop.f32.mrb[0].mxu0
    %v364 = vadd.f32 %v158, %v363
    %v365 = vpop.f32.mrb[0].mxu0
    %v366 = vadd.f32 %v162, %v365
    %367 = vdwg.mxu0
    %v368 = vmax.f32 %v360, 0.0
    %v369 = vmax.f32 %v362, 0.0
    %v370 = vmax.f32 %v364, 0.0
    %v371 = vmax.f32 %v366, 0.0
    %v372 = vld [vmem:[%s4 + $0x2] sm:$0x1]
    %v373 = vpack.c.bf16 %v370, %v368
    %v374 = vpack.c.bf16 %v371, %v369
    %v375 = vld [vmem:[#allocation4] sm:$0xf]
    %v376 = vld [vmem:[#allocation4 + $0x4] sm:$0xf]
    %v377 = vld [vmem:[#allocation4 + $0x8] sm:$0xf]
    %v378 = vld [vmem:[#allocation4 + $0xc] sm:$0xf]
    %v379 = vld [vmem:[#allocation4 + $0x10] sm:$0xf]
    %v380 = vld [vmem:[#allocation4 + $0x14] sm:$0xf]
    %v381 = vld [vmem:[#allocation4 + $0x18] sm:$0xf]
    %v382 = vld [vmem:[#allocation4 + $0x1c] sm:$0xf]
    %v383 = vld [vmem:[#allocation4 + $0x20] sm:$0xf]
    %v384 = vld [vmem:[#allocation4 + $0x24] sm:$0xf]
    %v385 = vld [vmem:[#allocation4 + $0x28] sm:$0xf]
    %v386 = vld [vmem:[#allocation4 + $0x2c] sm:$0xf]
    %v387 = vld [vmem:[#allocation4 + $0x30] sm:$0xf]
    %v388 = vld [vmem:[#allocation4 + $0x34] sm:$0xf]
    %v389 = vld [vmem:[#allocation4 + $0x38] sm:$0xf]
    %v390 = vld [vmem:[#allocation4 + $0x3c] sm:$0xf]
    %v391 = vld [vmem:[#allocation4 + $0x40] sm:$0xf]
    %v392 = vld [vmem:[#allocation4 + $0x44] sm:$0xf]
    %v393 = vld [vmem:[#allocation4 + $0x48] sm:$0xf]
    %v394 = vld [vmem:[#allocation4 + $0x4c] sm:$0xf]
    %v395 = vld [vmem:[#allocation4 + $0x50] sm:$0xf]
    %v396 = vld [vmem:[#allocation4 + $0x54] sm:$0xf]
    %v397 = vld [vmem:[#allocation4 + $0x58] sm:$0xf]
    %v398 = vld [vmem:[#allocation4 + $0x5c] sm:$0xf]
    %v399 = vld [vmem:[#allocation4 + $0x60] sm:$0xf]
    %v400 = vld [vmem:[#allocation4 + $0x64] sm:$0xf]
    %v401 = vld [vmem:[#allocation4 + $0x68] sm:$0xf]
    %v402 = vld [vmem:[#allocation4 + $0x6c] sm:$0xf]
    %v403 = vld [vmem:[#allocation4 + $0x70] sm:$0xf]
    %v404 = vld [vmem:[#allocation4 + $0x74] sm:$0xf]
    %v405 = vld [vmem:[#allocation4 + $0x78] sm:$0xf]
    %v406 = vld [vmem:[#allocation4 + $0x7c] sm:$0xf]
    %v408 = vlaneseq
    %v409 = vshrl.u32 %v408, 7
    %v410 = vsub.s32 0, %v409
    %v411 = vrot.slane %v372, %v410
    %v445 = vunpack.c.l.b16 %v375
    %v446 = vunpack.c.l.b16 %v376
    %v447 = vunpack.c.l.b16 %v377
    %v448 = vunpack.c.l.b16 %v378
    %v449 = vunpack.c.l.b16 %v379
    %v450 = vunpack.c.l.b16 %v380
    %v451 = vunpack.c.l.b16 %v381
    %v452 = vunpack.c.l.b16 %v382
    %v453 = vunpack.c.l.b16 %v383
    %v454 = vunpack.c.l.b16 %v384
    %v455 = vunpack.c.l.b16 %v385
    %v456 = vunpack.c.l.b16 %v386
    %v457 = vunpack.c.l.b16 %v387
    %v458 = vunpack.c.l.b16 %v388
    %v459 = vunpack.c.l.b16 %v389
    %v460 = vunpack.c.l.b16 %v390
    %v461 = vunpack.c.l.b16 %v391
    %v462 = vunpack.c.l.b16 %v392
    %v463 = vunpack.c.l.b16 %v393
    %v464 = vunpack.c.l.b16 %v394
    %v465 = vunpack.c.l.b16 %v395
    %v466 = vunpack.c.l.b16 %v396
    %v467 = vunpack.c.l.b16 %v397
    %v468 = vunpack.c.l.b16 %v398
    %v469 = vunpack.c.l.b16 %v399
    %v470 = vunpack.c.l.b16 %v400
    %v471 = vunpack.c.l.b16 %v401
    %v472 = vunpack.c.l.b16 %v402
    %v473 = vunpack.c.l.b16 %v403
    %v474 = vunpack.c.l.b16 %v404
    %v475 = vunpack.c.l.b16 %v405
    %v476 = vunpack.c.l.b16 %v406
    %v477 = vpack.c.b16 %v446, %v445
    %v478 = vpack.c.b16 %v448, %v447
    %v479 = vpack.c.b16 %v450, %v449
    %v480 = vpack.c.b16 %v452, %v451
    %v481 = vpack.c.b16 %v454, %v453
    %v482 = vpack.c.b16 %v456, %v455
    %v483 = vpack.c.b16 %v458, %v457
    %v484 = vpack.c.b16 %v460, %v459
    %v485 = vpack.c.b16 %v462, %v461
    %v486 = vpack.c.b16 %v464, %v463
    %v487 = vpack.c.b16 %v466, %v465
    %v488 = vpack.c.b16 %v468, %v467
    %v489 = vpack.c.b16 %v470, %v469
    %v490 = vpack.c.b16 %v472, %v471
    %v491 = vpack.c.b16 %v474, %v473
    %v492 = vpack.c.b16 %v476, %v475
    %509 = vmatprep.subr.bf16.mxu0 0
    %510 = vmatpush1.bf16.msra.mxu0 %v477
    %511 = vmatprep.subr.bf16.mxu0 0
    %512 = vmatpush1.bf16.msra.mxu0 %v478
    %513 = vmatprep.subr.bf16.mxu0 0
    %514 = vmatpush1.bf16.msra.mxu0 %v479
    %515 = vmatprep.subr.bf16.mxu0 0
    %516 = vmatpush1.bf16.msra.mxu0 %v480
    %517 = vmatprep.subr.bf16.mxu0 0
    %518 = vmatpush1.bf16.msra.mxu0 %v481
    %519 = vmatprep.subr.bf16.mxu0 0
    %520 = vmatpush1.bf16.msra.mxu0 %v482
    %521 = vmatprep.subr.bf16.mxu0 0
    %522 = vmatpush1.bf16.msra.mxu0 %v483
    %523 = vmatprep.subr.bf16.mxu0 0
    %524 = vmatpush1.bf16.msra.mxu0 %v484
    %525 = vmatprep.subr.bf16.mxu0 0
    %526 = vmatpush1.bf16.msra.mxu0 %v485
    %527 = vmatprep.subr.bf16.mxu0 0
    %528 = vmatpush1.bf16.msra.mxu0 %v486
    %529 = vmatprep.subr.bf16.mxu0 0
    %530 = vmatpush1.bf16.msra.mxu0 %v487
    %531 = vmatprep.subr.bf16.mxu0 0
    %532 = vmatpush1.bf16.msra.mxu0 %v488
    %533 = vmatprep.subr.bf16.mxu0 0
    %534 = vmatpush1.bf16.msra.mxu0 %v489
    %535 = vmatprep.subr.bf16.mxu0 0
    %536 = vmatpush1.bf16.msra.mxu0 %v490
    %537 = vmatprep.subr.bf16.mxu0 0
    %538 = vmatpush1.bf16.msra.mxu0 %v491
    %539 = vmatprep.subr.bf16.mxu0 0
    %540 = vmatpush1.bf16.msra.mxu0 %v492
    %541 = vmatprep.mubr.bf16.mxu0 %v374
    %542 = vmatmul.mubr.bf16.gmra.mrb[0].mxu0 %v373
    %v543 = vpop.f32.mrb[0].mxu0
    %v544 = vadd.f32 %v411, %v543
    %v545 = vpop.f32.mrb[0].mxu0
    %v546 = vpop.f32.mrb[0].mxu0
    %v547 = vadd.f32 %v411, %v546
    %v548 = vpop.f32.mrb[0].mxu0
    %549 = vdwg.mxu0
    %v550 = vtanh.pop %v544
    %v551 = vtanh.pop %v547
    %v552 = vadd.f32 %v550, 1.0
    %v553 = vadd.f32 %v551, 1.0
    %v554 = vmul.f32 %v552, 3.5
    %v555 = vmul.f32 %v553, 3.5
    %v556 = vadd.f32 %v554, -5.0
    %v557 = vadd.f32 %v555, -5.0
    %v558 = vlaneseq
    %v559 = vand.u32 %v558, 127
    %vm560 = vcmp.lt.s32.totalorder %v559, 4
    %v561 = vsel %vm560, %v544, %v556
    %v562 = vsel %vm560, %v547, %v557
    %v563 = vpack.c.bf16 %v562, %v561
    %v565 = vunpack.c.l.b16 %v563
    %v566 = vunpack.c.h.b16 %v563
    %v567 = vpack.c.b16 %v565, %v565
    %v568 = vpack.c.b16 %v566, %v566
    %571 = vst [vmem:[%s5] sm:$0xf] %v567
    %572 = vst [vmem:[%s5 + $0x4] sm:$0xf] %v568
    // Predicated region
    $region30: #{actor_forward.1} parent=1 // pred_check
      _
    $region31: #{actor_forward.1} parent=1 // pred_check_branch
      %574 = sbr.rel (0) target = $region33
    $region32: #{actor_forward.1} parent=1 // pred_region
      _
    $region33: #{actor_forward.1} parent=1 // pred_fallthru
      _
    // Predicated region
    $region34: #{actor_forward.1} parent=1 // pred_check
      _
    $region35: #{actor_forward.1} parent=1 // pred_check_branch
      %576 = sbr.rel (0) target = $region37
    $region36: #{actor_forward.1} parent=1 // pred_region
      _
    $region37: #{actor_forward.1} parent=1 // pred_fallthru
      _
    %577 = vsyncpa [#allocation3], 1
    %578 = vsyncpa [#allocation5], 1

</llo_original>
